<compile_context>
chip_gen: v7x
topology: tpu7x:2x2x1
jax: 0.10.0
libtpu: 0.0.40
codegen_flags: <defaults>
</compile_context>

<pallas_src>
import functools

import jax
import jax.numpy as jnp
from jax.experimental import pallas as pl
from jax.experimental.pallas import tpu as pltpu

_LANES = 512          # lane-dense last dim (multiple of 128)
_BLOCK_ROWS = 1024    # 1024 x 512 x 4 B = 2 MiB per block (VMEM-safe on v7x)


def _round_up(a: int, b: int) -> int:
    return (a + b - 1) // b * b


def _replace_kernel(x_ref, bits_ref, o_ref, *, thr_minus_1: int, ix: int):
    """Per-tile Bernoulli replacement.

    x_ref    : (block_rows, 512) int32 tile of input indices.
    bits_ref : (block_rows, 512) uint32 tile of uniform random bits.
    o_ref    : (block_rows, 512) int32 tile of output indices.

    Replace an element with `ix` iff its random bits are <= thr_minus_1,
    i.e. with probability (thr_minus_1 + 1) / 2^32 == p.
    """
    replace_mask = bits_ref[...] <= jnp.uint32(thr_minus_1)
    o_ref[...] = jnp.where(replace_mask, jnp.int32(ix), x_ref[...])


@functools.partial(jax.jit, static_argnames=("p", "ix"))
def _replace_train(x, seed, *, p: float, ix: int):
    orig_shape = x.shape
    orig_dtype = x.dtype

    flat = x.reshape(-1)
    if flat.dtype != jnp.int32:
        # NOTE: wider-than-int32 indices are truncated (typical vocab indices fit).
        flat = flat.astype(jnp.int32)
    n = flat.shape[0]

    # Lane-dense 2-D layout; block rows bounded so VMEM usage is constant.
    rows = pl.cdiv(max(n, 1), _LANES)
    block_rows = min(_BLOCK_ROWS, _round_up(rows, 8))
    total_rows = _round_up(rows, block_rows)
    grid = total_rows // block_rows
    total = total_rows * _LANES

    # Pad only the tail (no zeros+scatter full-array pass).
    padded = jnp.pad(flat, (0, total - n)).reshape(total_rows, _LANES)

    # Uniform random bits, one uint32 per element.
    key = jax.random.PRNGKey(seed)
    bits = jax.random.bits(key, (total_rows, _LANES), dtype=jnp.uint32)

    # Integer-space Bernoulli threshold: P(bits <= thr-1) = thr / 2^32 ~= p.
    thr = int(round(p * (2 ** 32)))
    thr = max(1, min(thr, 2 ** 32))
    thr_minus_1 = thr - 1

    out = pl.pallas_call(
        functools.partial(_replace_kernel, thr_minus_1=thr_minus_1, ix=int(ix)),
        out_shape=jax.ShapeDtypeStruct((total_rows, _LANES), jnp.int32),
        grid_spec=pltpu.PrefetchScalarGridSpec(
            num_scalar_prefetch=0,
            grid=(grid,),
            in_specs=[
                pl.BlockSpec((block_rows, _LANES), lambda i: (i, 0)),
                pl.BlockSpec((block_rows, _LANES), lambda i: (i, 0)),
            ],
            out_specs=pl.BlockSpec((block_rows, _LANES), lambda i: (i, 0)),
        ),
        compiler_params=pltpu.CompilerParams(
            dimension_semantics=("parallel",)),
    )(padded, bits)

    out = out.reshape(-1)[:n].reshape(orig_shape)
    if out.dtype != orig_dtype:
        out = out.astype(orig_dtype)
    return out


def replace_forward(x, seed: int, p: float = 0.5, ix: int = 5,
                    training: bool = True):
    """JAX/Pallas equivalent of Replace.forward.

    Each element of the integer tensor `x` is replaced with `ix` with
    probability `p` (training mode only); eval mode or p <= 0 is identity.
    """
    if (not training) or p <= 0.0:
        return x
    return _replace_train(x, jnp.int32(seed), p=float(p), ix=int(ix))


if __name__ == "__main__":
    key = jax.random.PRNGKey(0)
    # Vector of integer indices, values in [0, 5), length 20 (as in the docstring).
    x = jax.random.randint(key, (20,), 0, 5, dtype=jnp.int32)

    # Training mode, p = 0.5, ix = 5.
    y = jax.block_until_ready(replace_forward(x, seed=0, p=0.5, ix=5, training=True))
    assert y.shape == x.shape and y.dtype == x.dtype
    # Every element is either the original value or the special index.
    assert bool(jnp.all((y == x) | (y == 5)))

    # p = 0.0 -> identity.
    y0 = jax.block_until_ready(replace_forward(x, seed=1, p=0.0, ix=5))
    assert bool(jnp.all(y0 == x))

    # p = 1.0 -> everything replaced by ix.
    y1 = jax.block_until_ready(replace_forward(x, seed=2, p=1.0, ix=5))
    assert bool(jnp.all(y1 == 5))

    # Eval mode -> identity regardless of p.
    ye = jax.block_until_ready(replace_forward(x, seed=3, p=0.5, ix=5, training=False))
    assert bool(jnp.all(ye == x))

    # Different seeds -> different results, and ~p*n replacements on average.
    counts = []
    distinct = set()
    for s in range(200):
        ys = jax.block_until_ready(replace_forward(x, seed=s, p=0.5, ix=5))
        counts.append(int(jnp.sum(ys == 5)))
        distinct.add(tuple(int(v) for v in ys))
    avg = sum(counts) / len(counts)
    assert len(distinct) > 20
    assert 0.5 * x.shape[0] - 2.0 <= avg <= 0.5 * x.shape[0] + 2.0

    print("KERNEL_OK")
</pallas_src>

<mosaic_0001>
module attributes {stable_mosaic.version = 11 : i64} {
  func.func @_replace_kernel(%arg0: i32, %arg1: memref<8x512xi32, #tpu.memory_space<vmem>>, %arg2: memref<8x512xi32, #tpu.memory_space<vmem>>, %arg3: memref<8x512xi32, #tpu.memory_space<vmem>>) attributes {dimension_semantics = [#tpu.dimension_semantics<parallel>], iteration_bounds = array<i64: 1>, scalar_prefetch = 0 : i64, scratch_operands = 0 : i64, tpu.core_type = #tpu.core_type<tc>, window_params = [{transform_indices = @transform_0, window_bounds = array<i64: 8, 512>}, {transform_indices = @transform_1, window_bounds = array<i64: 8, 512>}, {transform_indices = @transform_2, window_bounds = array<i64: 8, 512>}]} {
    %c0 = arith.constant 0 : index
    %c0_0 = arith.constant 0 : index
    %0 = vector.load %arg2[%c0, %c0_0] : memref<8x512xi32, #tpu.memory_space<vmem>>, vector<8x512xi32>
    %c2147483647_i32 = arith.constant 2147483647 : i32
    %1 = vector.broadcast %c2147483647_i32 : i32 to vector<8x512xi32>
    %2 = arith.cmpi ule, %0, %1 : vector<8x512xi32>
    %c0_1 = arith.constant 0 : index
    %c0_2 = arith.constant 0 : index
    %3 = vector.load %arg1[%c0_1, %c0_2] : memref<8x512xi32, #tpu.memory_space<vmem>>, vector<8x512xi32>
    %c5_i32 = arith.constant 5 : i32
    %4 = vector.broadcast %c5_i32 : i32 to vector<8x512xi32>
    %5 = arith.select %2, %4, %3 : vector<8x512xi1>, vector<8x512xi32>
    %c0_3 = arith.constant 0 : index
    %c0_4 = arith.constant 0 : index
    %6 = vector.load %arg3[%c0_3, %c0_4] : memref<8x512xi32, #tpu.memory_space<vmem>>, vector<8x512xi32>
    tpu.vector_store %arg3[%c0_3, %c0_4], %5 {strides = array<i32>} : memref<8x512xi32, #tpu.memory_space<vmem>>, vector<8x512xi32>,
    return
  }
  func.func @transform_0(%arg0: i32) -> (i32, i32) {
    %c0_i32 = arith.constant 0 : i32
    %c0_i32_0 = arith.constant 0 : i32
    return %arg0, %c0_i32 : i32, i32
  }
  func.func @transform_1(%arg0: i32) -> (i32, i32) {
    %c0_i32 = arith.constant 0 : i32
    %c0_i32_0 = arith.constant 0 : i32
    return %arg0, %c0_i32 : i32, i32
  }
  func.func @transform_2(%arg0: i32) -> (i32, i32) {
    %c0_i32 = arith.constant 0 : i32
    %c0_i32_0 = arith.constant 0 : i32
    return %arg0, %c0_i32 : i32, i32
  }
}

</mosaic_0001>

<llo_original>
// kernel: _replace_train.1
$region0: #{_replace_train.1}
  #allocation0 [shape = 'u32[]', space=smem, size = 0x4, offset = 0x4, fixed_abs, tag = 'smem constant byte address 0x4 - core index']
  #allocation1 [shape = 'u32[144,128]{1,0:T(1,128)}', space=vmem, size = 0x12000, scoped, tag = 'internal scratch']
  %s0 = inlined_call_operand.vmem [shape: s32[8,512], index: 0, kind: input, shape index: {}]
  %s1 = inlined_call_operand.vmem [shape: u32[8,512], index: 1, kind: input, shape index: {}]
  %s2 = inlined_call_operand.vmem [shape: s32[8,512], index: 2, kind: output, shape index: {}]
  %s3 = sld [smem:[#allocation0]]
  $region18: #{_replace_train.1} parent=0
    _
  %s5 = ssub.s32 1, %s3
  %s6 = scalar_select 0, %s5, %s3
  // Predicated region
  $region2: #{_replace_train.1} parent=0 // pred_check
    _
  $region3: #{_replace_train.1} parent=0 // pred_check_branch
    %8 = sbr.rel (0) target = $region5
  $region4: #{_replace_train.1} parent=0 // pred_region
    _
  $region5: #{_replace_train.1} parent=0 // pred_fallthru
    _
  // Predicated region
  $region6: #{_replace_train.1} parent=0 // pred_check
    _
  $region7: #{_replace_train.1} parent=0 // pred_check_branch
    %10 = sbr.rel (0) target = $region9
  $region8: #{_replace_train.1} parent=0 // pred_region
    _
  $region9: #{_replace_train.1} parent=0 // pred_fallthru
    _
  %v11 = vld [vmem:[%s1] sm:$0xff]
  %v12 = vld [vmem:[%s1 + $0x8] sm:$0xff]
  %v13 = vld [vmem:[%s1 + $0x10] sm:$0xff]
  %v14 = vld [vmem:[%s1 + $0x18] sm:$0xff]
  %vm15 = vcmp.le.u32.totalorder %v11, 2147483647
  %vm16 = vcmp.le.u32.totalorder %v12, 2147483647
  %vm17 = vcmp.le.u32.totalorder %v13, 2147483647
  %vm18 = vcmp.le.u32.totalorder %v14, 2147483647
  %v19 = vld [vmem:[%s0] sm:$0xff]
  %v20 = vld [vmem:[%s0 + $0x8] sm:$0xff]
  %v21 = vld [vmem:[%s0 + $0x10] sm:$0xff]
  %v22 = vld [vmem:[%s0 + $0x18] sm:$0xff]
  %v23 = vsel %vm15, 5, %v19
  %v24 = vsel %vm16, 5, %v20
  %v25 = vsel %vm17, 5, %v21
  %v26 = vsel %vm18, 5, %v22
  %27 = vst [vmem:[%s2] sm:$0xff] %v23
  %28 = vst [vmem:[%s2 + $0x8] sm:$0xff] %v24
  %29 = vst [vmem:[%s2 + $0x10] sm:$0xff] %v25
  %30 = vst [vmem:[%s2 + $0x18] sm:$0xff] %v26
  // Predicated region
  $region10: #{_replace_train.1} parent=0 // pred_check
    _
  $region11: #{_replace_train.1} parent=0 // pred_check_branch
    %32 = sbr.rel (0) target = $region13
  $region12: #{_replace_train.1} parent=0 // pred_region
    _
  $region13: #{_replace_train.1} parent=0 // pred_fallthru
    _
  // Predicated region
  $region14: #{_replace_train.1} parent=0 // pred_check
    _
  $region15: #{_replace_train.1} parent=0 // pred_check_branch
    %34 = sbr.rel (0) target = $region17
  $region16: #{_replace_train.1} parent=0 // pred_region
    _
  $region17: #{_replace_train.1} parent=0 // pred_fallthru
    _

</llo_original>
